<compile_context>
chip_gen: v5e
topology: v5e:2x2
jax: 0.10.0
libtpu: 0.0.40
codegen_flags: <defaults>
</compile_context>

<pallas_src>
import functools

import jax
import jax.numpy as jnp
from jax.experimental import pallas as pl
from jax.experimental.pallas import tpu as pltpu

_LANE = 128  # TPU lane width


def _round_up(x, m):
    return ((x + m - 1) // m) * m


def _pick_tile(n_pad, max_tile):
    """Largest multiple of 128 <= max_tile that divides n_pad (n_pad % 128 == 0)."""
    t = min(max_tile, n_pad)
    t = max(_LANE, (t // _LANE) * _LANE)
    while n_pad % t:
        t -= _LANE
    return t


def _gcn_layer_kernel(a_ref, x_ref, w_ref, b_ref, o_ref, acc_ref, *, apply_relu):
    """One GCN layer:  out = act( (A_hat @ X) @ W + b ), tiled over (M, K).

    a_ref  : (tm, tk)      bf16 adjacency tile
    x_ref  : (tk, C_pad)   bf16 feature row-block
    w_ref  : (C_pad, F_pad) f32 weight (whole, small)
    b_ref  : (1, F_pad)    f32 bias
    o_ref  : (tm, F_pad)   output row tile
    acc_ref: (tm, C_pad)   f32 VMEM accumulator for A_hat @ X
    """
    k = pl.program_id(1)

    @pl.when(k == 0)
    def _():
        acc_ref[...] = jnp.zeros_like(acc_ref)

    acc_ref[...] += jnp.dot(a_ref[...], x_ref[...],
                            preferred_element_type=jnp.float32)

    @pl.when(k == pl.num_programs(1) - 1)
    def _():
        out = jnp.dot(acc_ref[...], w_ref[...],
                      preferred_element_type=jnp.float32) + b_ref[...]
        if apply_relu:
            out = jnp.maximum(out, 0.0)
        o_ref[...] = out.astype(o_ref.dtype)


def gcn_layer(a, x, w, b, *, apply_relu, out_dtype, max_tile=512):
    """Single GCN layer as a tiled pallas_call.  All inputs already padded."""
    n_pad = a.shape[0]
    c_pad = x.shape[1]
    f_pad = w.shape[1]

    tm = _pick_tile(n_pad, max_tile)
    tk = _pick_tile(n_pad, max_tile)
    grid = (n_pad // tm, n_pad // tk)

    flops = 2 * n_pad * n_pad * c_pad + 2 * n_pad * c_pad * f_pad
    out_bytes = n_pad * f_pad * jnp.dtype(out_dtype).itemsize
    bytes_accessed = a.nbytes + x.nbytes + w.nbytes + b.nbytes + out_bytes

    kernel = functools.partial(_gcn_layer_kernel, apply_relu=apply_relu)

    return pl.pallas_call(
        kernel,
        out_shape=jax.ShapeDtypeStruct((n_pad, f_pad), out_dtype),
        grid_spec=pltpu.PrefetchScalarGridSpec(
            num_scalar_prefetch=0,
            grid=grid,
            in_specs=[
                pl.BlockSpec((tm, tk), lambda m, k: (m, k)),        # A_hat tile
                pl.BlockSpec((tk, c_pad), lambda m, k: (k, 0)),     # X row-block
                pl.BlockSpec((c_pad, f_pad), lambda m, k: (0, 0)),  # W (whole)
                pl.BlockSpec((1, f_pad), lambda m, k: (0, 0)),      # bias
            ],
            out_specs=pl.BlockSpec((tm, f_pad), lambda m, k: (m, 0)),
            scratch_shapes=[pltpu.VMEM((tm, c_pad), jnp.float32)],
        ),
        compiler_params=pltpu.CompilerParams(
            dimension_semantics=("parallel", "arbitrary"),
            vmem_limit_bytes=48 * 1024 * 1024,
        ),
        cost_estimate=pl.CostEstimate(
            flops=flops, transcendentals=0, bytes_accessed=bytes_accessed),
    )(a, x, w, b)


def gcn2_forward(a_hat, x, w1, b1, w2, b2, *, max_tile=512):
    """Full 2-layer GCN forward (eval mode)."""
    n, cin = x.shape
    hid = w1.shape[1]
    cout = w2.shape[1]

    n_pad = max(_LANE, _round_up(n, _LANE))
    cin_pad = max(_LANE, _round_up(cin, _LANE))
    hid_pad = max(_LANE, _round_up(hid, _LANE))
    cout_pad = max(_LANE, _round_up(cout, _LANE))

    # Zero-pad everything; zero rows/cols contribute nothing and the padded
    # output rows/cols are sliced off at the end.  A_hat / features in bf16,
    # weights/bias in f32, all accumulation in f32 on the MXU.
    a_p = jnp.zeros((n_pad, n_pad), jnp.bfloat16).at[:n, :n].set(
        a_hat.astype(jnp.bfloat16))
    x_p = jnp.zeros((n_pad, cin_pad), jnp.bfloat16).at[:n, :cin].set(
        x.astype(jnp.bfloat16))
    w1_p = jnp.zeros((cin_pad, hid_pad), jnp.float32).at[:cin, :hid].set(w1)
    b1_p = jnp.zeros((1, hid_pad), jnp.float32).at[:, :hid].set(b1)
    w2_p = jnp.zeros((hid_pad, cout_pad), jnp.float32).at[:hid, :cout].set(w2)
    b2_p = jnp.zeros((1, cout_pad), jnp.float32).at[:, :cout].set(b2)

    # Layer 1: h = relu(A_hat @ X @ W1 + b1)   (kept bf16 for layer 2)
    h = gcn_layer(a_p, x_p, w1_p, b1_p, apply_relu=True,
                  out_dtype=jnp.bfloat16, max_tile=max_tile)

    # F.dropout(p=0.5, training=False) == identity in eval mode.

    # Layer 2: out = A_hat @ h @ W2 + b2
    out = gcn_layer(a_p, h, w2_p, b2_p, apply_relu=False,
                    out_dtype=jnp.float32, max_tile=max_tile)
    return out[:n, :cout]


def build_normalized_adjacency(edge_index, num_nodes):
    """Dense GCN normalization: A_hat = D^-1/2 (A + I) D^-1/2.

    edge_index: (2, E) int32, row 0 = source, row 1 = destination.
    Aggregation is source -> target, so A[dst, src] += 1 (duplicates add).
    """
    src = edge_index[0]
    dst = edge_index[1]
    a = jnp.zeros((num_nodes, num_nodes), jnp.float32)
    a = a.at[dst, src].add(1.0)
    a = a + jnp.eye(num_nodes, dtype=jnp.float32)      # add self-loops
    deg = jnp.sum(a, axis=1)                            # degree incl. self-loop
    d_inv_sqrt = jnp.where(deg > 0, 1.0 / jnp.sqrt(deg), 0.0)
    return d_inv_sqrt[:, None] * a * d_inv_sqrt[None, :]


def init_params(key, in_channels, hidden_channels, out_channels):
    """Deterministic glorot-style init (shapes match torch_geometric GCNConv)."""
    k1, k2 = jax.random.split(key)

    def glorot(k, fan_in, fan_out):
        limit = jnp.sqrt(6.0 / (fan_in + fan_out))
        return jax.random.uniform(
            k, (fan_in, fan_out), jnp.float32, -limit, limit
        )

    w1 = glorot(k1, in_channels, hidden_channels)
    b1 = jnp.zeros((1, hidden_channels), jnp.float32)
    w2 = glorot(k2, hidden_channels, out_channels)
    b2 = jnp.zeros((1, out_channels), jnp.float32)
    return w1, b1, w2, b2


if __name__ == "__main__":
    # Small synthetic traffic graph; num_nodes pads to 256, and with
    # max_tile=128 the kernel runs a real (2 row tiles x 2 reduction tiles)
    # grid, exercising the accumulator init/finalize path and lane padding.
    num_nodes = 200
    in_channels = 4
    hidden_channels = 32
    out_channels = 8
    num_edges = 600

    key = jax.random.PRNGKey(0)
    kx, ke1, ke2, kp = jax.random.split(key, 4)

    x = jax.random.normal(kx, (num_nodes, in_channels), jnp.float32)
    src = jax.random.randint(ke1, (num_edges,), 0, num_nodes, jnp.int32)
    dst = jax.random.randint(ke2, (num_edges,), 0, num_nodes, jnp.int32)
    edge_index = jnp.stack([src, dst], axis=0)  # (2, E)

    w1, b1, w2, b2 = init_params(kp, in_channels, hidden_channels, out_channels)

    a_hat = build_normalized_adjacency(edge_index, num_nodes)

    out = gcn2_forward(a_hat, x, w1, b1, w2, b2, max_tile=128)
    jax.block_until_ready(out)

    # Pure-JAX f32 reference; bf16 adjacency/features -> loosened tolerance.
    ref = a_hat @ jnp.maximum(a_hat @ (x @ w1) + b1, 0.0) @ w2 + b2
    assert out.shape == (num_nodes, out_channels)
    err = float(jnp.max(jnp.abs(out - ref)))
    assert jnp.allclose(out, ref, atol=5e-2, rtol=5e-2), err

    print("KERNEL_OK")
</pallas_src>

<mosaic_0001>
module attributes {stable_mosaic.version = 11 : i64} {
  func.func @_gcn_layer_kernel(%arg0: i32, %arg1: i32, %arg2: memref<128x128xbf16, #tpu.memory_space<vmem>>, %arg3: memref<128x128xbf16, #tpu.memory_space<vmem>>, %arg4: memref<128x128xf32, #tpu.memory_space<vmem>>, %arg5: memref<1x128xf32, #tpu.memory_space<vmem>>, %arg6: memref<128x128xbf16, #tpu.memory_space<vmem>>, %arg7: memref<128x128xf32, #tpu.memory_space<vmem>>) attributes {dimension_semantics = [#tpu.dimension_semantics<parallel>, #tpu.dimension_semantics<arbitrary>], iteration_bounds = array<i64: 2, 2>, scalar_prefetch = 0 : i64, scratch_operands = 1 : i64, tpu.core_type = #tpu.core_type<tc>, window_params = [{transform_indices = @transform_0, window_bounds = array<i64: 128, 128>}, {transform_indices = @transform_1, window_bounds = array<i64: 128, 128>}, {pipeline_mode = #tpu.pipeline_mode<synchronous>, transform_indices = @transform_2, window_bounds = array<i64: 128, 128>}, {pipeline_mode = #tpu.pipeline_mode<synchronous>, transform_indices = @transform_3, window_bounds = array<i64: 1, 128>}, {transform_indices = @transform_4, window_bounds = array<i64: 128, 128>}]} {
    %c0_i32 = arith.constant 0 : i32
    %0 = arith.cmpi eq, %arg1, %c0_i32 : i32
    %1 = arith.extui %0 : i1 to i32
    %c0_i32_0 = arith.constant 0 : i32
    %2 = arith.cmpi ne, %1, %c0_i32_0 : i32
    scf.if %2 {
      %cst_9 = arith.constant 0.000000e+00 : f32
      %12 = vector.broadcast %cst_9 : f32 to vector<128x128xf32>
      %c0_10 = arith.constant 0 : index
      %c0_11 = arith.constant 0 : index
      %13 = vector.load %arg7[%c0_10, %c0_11] : memref<128x128xf32, #tpu.memory_space<vmem>>, vector<128x128xf32>
      tpu.vector_store %arg7[%c0_10, %c0_11], %12 {strides = array<i32>} : memref<128x128xf32, #tpu.memory_space<vmem>>, vector<128x128xf32>,
    } else {
    }
    %c0 = arith.constant 0 : index
    %c0_1 = arith.constant 0 : index
    %3 = vector.load %arg7[%c0, %c0_1] : memref<128x128xf32, #tpu.memory_space<vmem>>, vector<128x128xf32>
    %c0_2 = arith.constant 0 : index
    %c0_3 = arith.constant 0 : index
    %4 = vector.load %arg2[%c0_2, %c0_3] : memref<128x128xbf16, #tpu.memory_space<vmem>>, vector<128x128xbf16>
    %c0_4 = arith.constant 0 : index
    %c0_5 = arith.constant 0 : index
    %5 = vector.load %arg3[%c0_4, %c0_5] : memref<128x128xbf16, #tpu.memory_space<vmem>>, vector<128x128xbf16>
    %cst = arith.constant dense<0.000000e+00> : vector<128x128xf32>
    %6 = tpu.matmul %4, %5, %cst {dimension_numbers = #tpu.dot_dimension_numbers<[1], [0], [0], [1], [0, 0, 1, 1], [], []>} : vector<128x128xbf16>, vector<128x128xbf16>, vector<128x128xf32> -> vector<128x128xf32>
    %7 = arith.addf %3, %6 : vector<128x128xf32>
    %c0_6 = arith.constant 0 : index
    %c0_7 = arith.constant 0 : index
    %8 = vector.load %arg7[%c0_6, %c0_7] : memref<128x128xf32, #tpu.memory_space<vmem>>, vector<128x128xf32>
    tpu.vector_store %arg7[%c0_6, %c0_7], %7 {strides = array<i32>} : memref<128x128xf32, #tpu.memory_space<vmem>>, vector<128x128xf32>,
    %c1_i32 = arith.constant 1 : i32
    %9 = arith.cmpi eq, %arg1, %c1_i32 : i32
    %10 = arith.extui %9 : i1 to i32
    %c0_i32_8 = arith.constant 0 : i32
    %11 = arith.cmpi ne, %10, %c0_i32_8 : i32
    scf.if %11 {
      %c0_9 = arith.constant 0 : index
      %c0_10 = arith.constant 0 : index
      %12 = vector.load %arg7[%c0_9, %c0_10] : memref<128x128xf32, #tpu.memory_space<vmem>>, vector<128x128xf32>
      %c0_11 = arith.constant 0 : index
      %c0_12 = arith.constant 0 : index
      %13 = vector.load %arg4[%c0_11, %c0_12] : memref<128x128xf32, #tpu.memory_space<vmem>>, vector<128x128xf32>
      %cst_13 = arith.constant dense<0.000000e+00> : vector<128x128xf32>
      %14 = tpu.matmul %12, %13, %cst_13 {dimension_numbers = #tpu.dot_dimension_numbers<[1], [0], [0], [1], [0, 0, 1, 1], [], []>} : vector<128x128xf32>, vector<128x128xf32>, vector<128x128xf32> -> vector<128x128xf32>
      %c0_14 = arith.constant 0 : index
      %c0_15 = arith.constant 0 : index
      %15 = vector.load %arg5[%c0_14, %c0_15] : memref<1x128xf32, #tpu.memory_space<vmem>>, vector<1x128xf32>
      %16 = vector.broadcast %15 : vector<1x128xf32> to vector<128x128xf32>
      %17 = arith.addf %14, %16 : vector<128x128xf32>
      %cst_16 = arith.constant 0.000000e+00 : f32
      %18 = vector.broadcast %cst_16 : f32 to vector<128x128xf32>
      %19 = arith.maximumf %17, %18 : vector<128x128xf32>
      %20 = arith.truncf %19 : vector<128x128xf32> to vector<128x128xbf16>
      %c0_17 = arith.constant 0 : index
      %c0_18 = arith.constant 0 : index
      %21 = vector.load %arg6[%c0_17, %c0_18] : memref<128x128xbf16, #tpu.memory_space<vmem>>, vector<128x128xbf16>
      tpu.vector_store %arg6[%c0_17, %c0_18], %20 {strides = array<i32>} : memref<128x128xbf16, #tpu.memory_space<vmem>>, vector<128x128xbf16>,
    } else {
    }
    return
  }
  func.func @transform_0(%arg0: i32, %arg1: i32) -> (i32, i32) {
    %c0_i32 = arith.constant 0 : i32
    return %arg0, %arg1 : i32, i32
  }
  func.func @transform_1(%arg0: i32, %arg1: i32) -> (i32, i32) {
    %c0_i32 = arith.constant 0 : i32
    %c0_i32_0 = arith.constant 0 : i32
    return %arg1, %c0_i32 : i32, i32
  }
  func.func @transform_2(%arg0: i32, %arg1: i32) -> (i32, i32) {
    %c0_i32 = arith.constant 0 : i32
    %c0_i32_0 = arith.constant 0 : i32
    %c0_i32_1 = arith.constant 0 : i32
    return %c0_i32, %c0_i32_0 : i32, i32
  }
  func.func @transform_3(%arg0: i32, %arg1: i32) -> (i32, i32) {
    %c0_i32 = arith.constant 0 : i32
    %c0_i32_0 = arith.constant 0 : i32
    %c0_i32_1 = arith.constant 0 : i32
    return %c0_i32, %c0_i32_0 : i32, i32
  }
  func.func @transform_4(%arg0: i32, %arg1: i32) -> (i32, i32) {
    %c0_i32 = arith.constant 0 : i32
    %c0_i32_0 = arith.constant 0 : i32
    return %arg0, %c0_i32 : i32, i32
  }
}

</mosaic_0001>

<llo_original>
// kernel: tpu_custom_call.1
$region0: #{tpu_custom_call.1}
  #allocation0 [shape = 'u32[]', space=smem, size = 0x4, offset = 0x4, fixed_abs, tag = 'smem constant byte address 0x4 - core index']
  #allocation1 [shape = 'u32[72,128]{1,0:T(1,128)}', space=vmem, size = 0x9000, scoped, tag = 'internal scratch']
  #allocation2 [shape = 'f32[128,128]{1,0:T(8,128)}', space=vmem, size = 0x10000, scoped, tag = 'scratch operand']
  %s0 = inlined_call_operand.hbm [shape: bf16[256,256], index: 0, kind: input, shape index: {}]
  %s1 = inlined_call_operand.hbm [shape: bf16[256,128], index: 1, kind: input, shape index: {}]
  %s2 = inlined_call_operand.hbm [shape: f32[128,128], index: 2, kind: input, shape index: {}]
  %s3 = inlined_call_operand.vmem [shape: f32[1,128], index: 3, kind: input, shape index: {}]
  %s4 = inlined_call_operand.hbm [shape: bf16[256,128], index: 4, kind: output, shape index: {}]
  %s5 = sld [smem:[#allocation0]]
  $region69: #{tpu_custom_call.1} parent=0
    _
  %s7 = ssub.s32 1, %s5
  %s8 = scalar_select 0, %s7, %s5
  $region1: #{tpu_custom_call.1} parent=0
    #allocation3 [shape = 'u8[65536]{0}', space=vmem, size = 0x10000, scoped, tag = 'input window, operand 0']
    #allocation4 [shape = 's32[2]{0}', space=sflag, size = 0x8, scoped, tag = 'scoped memory for tpu_custom_call.1']
    #allocation5 [shape = 's32[2]{0}', space=sflag, size = 0x8, scoped, tag = 'scoped memory for tpu_custom_call.1']
    #allocation6 [shape = 'u8[65536]{0}', space=vmem, size = 0x10000, scoped, tag = 'input window, operand 1']
    #allocation7 [shape = 's32[2]{0}', space=sflag, size = 0x8, scoped, tag = 'scoped memory for tpu_custom_call.1']
    #allocation8 [shape = 'u8[65536]{0}', space=vmem, size = 0x10000, scoped, tag = 'input window, operand 2, single buffered']
    #allocation9 [shape = 'u8[65536]{0}', space=vmem, size = 0x10000, scoped, tag = 'output window, operand 0']
    %9 = vsyncpa [#allocation4], 0
    %s10 = scalar_lea.sflag [#allocation4], 1
    %11 = vsyncpa %s10, 0
    %12 = vsyncpa [#allocation7], 0
    %s13 = scalar_lea.sflag [#allocation7], 1
    %14 = vsyncpa %s13, 0
    %15 = vsyncpa [#allocation5], 0
    %s16 = scalar_lea.sflag [#allocation5], 1
    %17 = vsyncpa %s16, 0
    loop: start=0, step=1, limit=6
    $region2: #{tpu_custom_call.1} parent=1 // loop_pre_header
      _
    $region3: #{tpu_custom_call.1} parent=1 // loop_header
      %s19 = sphi 0, %s23
      %p20 = scmp.ge.s32.totalorder %s19, 6
      %s26 = sphi 0, %s38
      %s27 = sphi 0, %s34
      %s28 = sphi 0, %s26
      %s29 = sphi 0, %s27
      %s30 = sphi 0, %s28
      %s31 = sphi 0, %s29
      %s43 = sphi 0, %s45
      %s46 = sphi 0, %s43
      %s47 = sphi 0, %s46
      %s63 = sphi 0, %s47
      %s69 = sphi 0, %s71
      %s72 = sphi 0, %s69
      %s73 = sphi 0, %s72
      %s89 = sphi 0, %s73
      %s93 = sphi 0, %s93
      %s95 = sphi 0, %s93
      %s96 = sphi 0, %s95
      %s110 = sphi 0, %s96
      %s114 = sphi 0, %s114
      %s116 = sphi 0, %s114
      %s117 = sphi 0, %s116
      %s131 = sphi 0, %s117
      %s137 = sphi 0, %s139
      %s140 = sphi 0, %s137
      %s141 = sphi 0, %s140
      %s157 = sphi 0, %s141
    $region4: #{tpu_custom_call.1} parent=1 // loop_header_branch
      %22 = sbr.rel (%p20) target = $region8
    $region5: #{tpu_custom_call.1} parent=1 // loop_body
      %s24 = ssub.s32 %s19, 1
      %s25 = ssub.s32 %s19, 2
      %s32 = sadd.s32 1, %s27
      %p33 = scmp.ge.s32.totalorder %s32, 2
      %s34 = scalar_select %p33, 0, %s32
      %s35 = sadd.s32 1, %s26
      %s36 = scalar_select %p33, %s35, %s26
      %p37 = scmp.ge.s32.totalorder %s36, 2
      %s38 = scalar_select %p37, 0, %s36
      %s39 = ssub.s32 %s26, %s38
      %s40 = ssub.s32 %s27, %s34
      %s41 = sor.u32 %s39, %s40
      %p42 = scmp.eq.s32.totalorder %s41, 0
      %s44 = sadd.s32 %s43, 1
      %s45 = scalar_select %p42, %s43, %s44
      %p48 = pneg %p42
      %p49 = scmp.eq.s32.totalorder %s19, 3
      %p50 = por %p48, %p49
      %p51 = scmp.ne.s32.totalorder %s43, %s46
      %p52 = scmp.eq.s32.totalorder %s19, 0
      %p53 = por %p51, %p52
      %p54 = scmp.ne.s32.totalorder %s43, %s46
      %p55 = scmp.eq.s32.totalorder %s24, 3
      %p56 = por %p54, %p55
      %p57 = scmp.ne.s32.totalorder %s46, %s47
      %p58 = scmp.eq.s32.totalorder %s24, 0
      %p59 = por %p57, %p58
      %p60 = scmp.ne.s32.totalorder %s46, %s47
      %p61 = scmp.eq.s32.totalorder %s25, 3
      %p62 = por %p60, %p61
      %p64 = scmp.ne.s32.totalorder %s47, %s63
      %p65 = scmp.eq.s32.totalorder %s25, 0
      %p66 = por %p64, %p65
      %s67 = ssub.s32 %s27, %s34
      %p68 = scmp.eq.s32.totalorder %s67, 0
      %s70 = sadd.s32 %s69, 1
      %s71 = scalar_select %p68, %s69, %s70
      %p74 = pneg %p68
      %p75 = scmp.eq.s32.totalorder %s19, 3
      %p76 = por %p74, %p75
      %p77 = scmp.ne.s32.totalorder %s69, %s72
      %p78 = scmp.eq.s32.totalorder %s19, 0
      %p79 = por %p77, %p78
      %p80 = scmp.ne.s32.totalorder %s69, %s72
      %p81 = scmp.eq.s32.totalorder %s24, 3
      %p82 = por %p80, %p81
      %p83 = scmp.ne.s32.totalorder %s72, %s73
      %p84 = scmp.eq.s32.totalorder %s24, 0
      %p85 = por %p83, %p84
      %p86 = scmp.ne.s32.totalorder %s72, %s73
      %p87 = scmp.eq.s32.totalorder %s25, 3
      %p88 = por %p86, %p87
      %p90 = scmp.ne.s32.totalorder %s73, %s89
      %p91 = scmp.eq.s32.totalorder %s25, 0
      %p92 = por %p90, %p91
      %s94 = sadd.s32 %s93, 1
      %p97 = scmp.eq.s32.totalorder %s19, 3
      %p98 = scmp.ne.s32.totalorder %s93, %s95
      %p99 = scmp.eq.s32.totalorder %s19, 0
      %p100 = por %p98, %p99
      %p101 = scmp.ne.s32.totalorder %s93, %s95
      %p102 = scmp.eq.s32.totalorder %s24, 3
      %p103 = por %p101, %p102
      %p104 = scmp.ne.s32.totalorder %s95, %s96
      %p105 = scmp.eq.s32.totalorder %s24, 0
      %p106 = por %p104, %p105
      %p107 = scmp.ne.s32.totalorder %s95, %s96
      %p108 = scmp.eq.s32.totalorder %s25, 3
      %p109 = por %p107, %p108
      %p111 = scmp.ne.s32.totalorder %s96, %s110
      %p112 = scmp.eq.s32.totalorder %s25, 0
      %p113 = por %p111, %p112
      %s115 = sadd.s32 %s114, 1
      %p118 = scmp.eq.s32.totalorder %s19, 3
      %p119 = scmp.ne.s32.totalorder %s114, %s116
      %p120 = scmp.eq.s32.totalorder %s19, 0
      %p121 = por %p119, %p120
      %p122 = scmp.ne.s32.totalorder %s114, %s116
      %p123 = scmp.eq.s32.totalorder %s24, 3
      %p124 = por %p122, %p123
      %p125 = scmp.ne.s32.totalorder %s116, %s117
      %p126 = scmp.eq.s32.totalorder %s24, 0
      %p127 = por %p125, %p126
      %p128 = scmp.ne.s32.totalorder %s116, %s117
      %p129 = scmp.eq.s32.totalorder %s25, 3
      %p130 = por %p128, %p129
      %p132 = scmp.ne.s32.totalorder %s117, %s131
      %p133 = scmp.eq.s32.totalorder %s25, 0
      %p134 = por %p132, %p133
      %s135 = ssub.s32 %s26, %s38
      %p136 = scmp.eq.s32.totalorder %s135, 0
      %s138 = sadd.s32 %s137, 1
      %s139 = scalar_select %p136, %s137, %s138
      %p142 = pneg %p136
      %p143 = scmp.eq.s32.totalorder %s19, 3
      %p144 = por %p142, %p143
      %p145 = scmp.ne.s32.totalorder %s137, %s140
      %p146 = scmp.eq.s32.totalorder %s19, 0
      %p147 = por %p145, %p146
      %p148 = scmp.ne.s32.totalorder %s137, %s140
      %p149 = scmp.eq.s32.totalorder %s24, 3
      %p150 = por %p148, %p149
      %p151 = scmp.ne.s32.totalorder %s140, %s141
      %p152 = scmp.eq.s32.totalorder %s24, 0
      %p153 = por %p151, %p152
      %p154 = scmp.ne.s32.totalorder %s140, %s141
      %p155 = scmp.eq.s32.totalorder %s25, 3
      %p156 = por %p154, %p155
      %p158 = scmp.ne.s32.totalorder %s141, %s157
      %p159 = scmp.eq.s32.totalorder %s25, 0
      %p160 = por %p158, %p159
      %p161 = scmp.le.s32.totalorder 1, %s19
      %p162 = scmp.lt.s32.totalorder %s19, 5
      %p163 = pnand %p161, %p162
      %p164 = pneg %p163
      // Predicated region
      $region9: #{tpu_custom_call.1} parent=5 // pred_check
        _
      $region10: #{tpu_custom_call.1} parent=5 // pred_check_branch
        %166 = sbr.rel (%p163) target = $region12
      $region11: #{tpu_custom_call.1} parent=5 // pred_region
        %s167 = ssub.s32 %s19, 1
        // Predicated region
        $region13: #{tpu_custom_call.1} parent=11 // pred_check
          %p168 = pneg %p106
        $region14: #{tpu_custom_call.1} parent=11 // pred_check_branch
          %170 = sbr.rel (%p168) target = $region16
        $region15: #{tpu_custom_call.1} parent=11 // pred_region
          %172 = vsyncadd [#allocation7], 0
          %s173 = sshll.u32 %s2, 4
          %s174 = int_to_ptr.hbm [resolvable:$true] %s173
          %s175 = sshll.u32 [#allocation8], 4
          %s176 = int_to_ptr.vmem [resolvable:$true] %s175
          %181 = dma.hbm_to_vmem [thread:$0]  %s174, 2048, %s176, [#allocation7], 128, 128, 8
        $region16: #{tpu_custom_call.1} parent=11 // pred_fallthru
          _
        // Predicated region
        $region17: #{tpu_custom_call.1} parent=11 // pred_check
          %p182 = pneg %p127
        $region18: #{tpu_custom_call.1} parent=11 // pred_check_branch
          %184 = sbr.rel (%p182) target = $region20
        $region19: #{tpu_custom_call.1} parent=11 // pred_region
          _
        $region20: #{tpu_custom_call.1} parent=11 // pred_fallthru
          _
      $region12: #{tpu_custom_call.1} parent=5 // pred_fallthru
        _
      %p185 = scmp.lt.s32.totalorder %s19, 4
      // Predicated region
      $region21: #{tpu_custom_call.1} parent=5 // pred_check
        %p186 = pneg %p185
      $region22: #{tpu_custom_call.1} parent=5 // pred_check_branch
        %188 = sbr.rel (%p186) target = $region24
      $region23: #{tpu_custom_call.1} parent=5 // pred_region
        // Predicated region
        $region25: #{tpu_custom_call.1} parent=23 // pred_check
          %p189 = pneg %p53
        $region26: #{tpu_custom_call.1} parent=23 // pred_check_branch
          %191 = sbr.rel (%p189) target = $region28
        $region27: #{tpu_custom_call.1} parent=23 // pred_region
          %s192 = sand.u32 %s43, 1
          %s193 = scalar_lea.sflag [#allocation4], %s192
          %s194 = sand.u32 %s43, 1
          %s195 = smul.addr %s194, 64
          %s196 = scalar_lea.vmem [#allocation3], %s195
          %s197 = smul.u32 16, %s26
          %199 = vsyncadd %s193, 0
          %s200 = smul.addr %s197, 2
          %s201 = sadd.s32 %s27, %s200
          %s202 = smul.addr %s201, 4
          %s203 = scalar_lea.hbm %s0, %s202
          %s204 = sshll.u32 %s203, 4
          %s205 = int_to_ptr.hbm [resolvable:$true] %s204
          %s206 = sshll.u32 %s196, 4
          %s207 = int_to_ptr.vmem [resolvable:$true] %s206
          %212 = dma.hbm_to_vmem [thread:$0]  %s205, 1024, %s207, %s193, 128, 64, 4
        $region28: #{tpu_custom_call.1} parent=23 // pred_fallthru
          _
        // Predicated region
        $region29: #{tpu_custom_call.1} parent=23 // pred_check
          %p213 = pneg %p79
        $region30: #{tpu_custom_call.1} parent=23 // pred_check_branch
          %215 = sbr.rel (%p213) target = $region32
        $region31: #{tpu_custom_call.1} parent=23 // pred_region
          %s216 = sand.u32 %s19, 1
          %s217 = scalar_lea.sflag [#allocation7], %s216
          %s218 = sand.u32 %s69, 1
          %s219 = smul.addr %s218, 64
          %s220 = scalar_lea.vmem [#allocation6], %s219
          %s221 = smul.u32 16, %s27
          %223 = vsyncadd %s217, 0
          %s224 = smul.addr %s221, 4
          %s225 = scalar_lea.hbm %s1, %s224
          %s226 = sshll.u32 %s225, 4
          %s227 = int_to_ptr.hbm [resolvable:$true] %s226
          %s228 = sshll.u32 %s220, 4
          %s229 = int_to_ptr.vmem [resolvable:$true] %s228
          %234 = dma.hbm_to_vmem [thread:$0]  %s227, 1024, %s229, %s217, 64, 64, 4
        $region32: #{tpu_custom_call.1} parent=23 // pred_fallthru
          _
      $region24: #{tpu_custom_call.1} parent=5 // pred_fallthru
        _
      %p235 = scmp.le.s32.totalorder 1, %s19
      %p236 = scmp.lt.s32.totalorder %s19, 5
      %p237 = pnand %p235, %p236
      %p238 = pneg %p237
      // Predicated region
      $region33: #{tpu_custom_call.1} parent=5 // pred_check
        _
      $region34: #{tpu_custom_call.1} parent=5 // pred_check_branch
        %240 = sbr.rel (%p237) target = $region36
      $region35: #{tpu_custom_call.1} parent=5 // pred_region
        %s241 = ssub.s32 %s19, 1
        %s242 = sand.u32 %s46, 1
        %s243 = scalar_lea.sflag [#allocation4], %s242
        %s244 = sand.u32 %s46, 1
        %s245 = smul.addr %s244, 64
        %s246 = scalar_lea.vmem [#allocation3], %s245
        // Predicated region
        $region37: #{tpu_custom_call.1} parent=35 // pred_check
          %p247 = pneg %p59
        $region38: #{tpu_custom_call.1} parent=35 // pred_check_branch
          %249 = sbr.rel (%p247) target = $region40
        $region39: #{tpu_custom_call.1} parent=35 // pred_region
          %251 = dma.done %s243, 1024
        $region40: #{tpu_custom_call.1} parent=35 // pred_fallthru
          _
        %s252 = sand.u32 %s24, 1
        %s253 = scalar_lea.sflag [#allocation7], %s252
        %s254 = sand.u32 %s72, 1
        %s255 = smul.addr %s254, 64
        %s256 = scalar_lea.vmem [#allocation6], %s255
        // Predicated region
        $region41: #{tpu_custom_call.1} parent=35 // pred_check
          %p257 = pneg %p85
        $region42: #{tpu_custom_call.1} parent=35 // pred_check_branch
          %259 = sbr.rel (%p257) target = $region44
        $region43: #{tpu_custom_call.1} parent=35 // pred_region
          %261 = dma.done %s253, 1024
        $region44: #{tpu_custom_call.1} parent=35 // pred_fallthru
          _
        // Predicated region
        $region45: #{tpu_custom_call.1} parent=35 // pred_check
          %p262 = pneg %p106
        $region46: #{tpu_custom_call.1} parent=35 // pred_check_branch
          %264 = sbr.rel (%p262) target = $region48
        $region47: #{tpu_custom_call.1} parent=35 // pred_region
          %266 = dma.done [#allocation7], 2048
        $region48: #{tpu_custom_call.1} parent=35 // pred_fallthru
          _
        %s267 = sand.u32 %s46, 1
        %s268 = scalar_lea.sflag [#allocation4], %s267
        %s269 = sand.u32 %s46, 1
        %s270 = smul.addr %s269, 64
        %s271 = scalar_lea.vmem [#allocation3], %s270
        %p272 = pneg %p59
        %p273 = pneg %p56
        %s274 = sand.u32 %s24, 1
        %s275 = scalar_lea.sflag [#allocation7], %s274
        %s276 = sand.u32 %s72, 1
        %s277 = smul.addr %s276, 64
        %s278 = scalar_lea.vmem [#allocation6], %s277
        %p279 = pneg %p85
        %p280 = pneg %p82
        %p281 = pneg %p106
        %p282 = pneg %p103
        %p283 = pneg %p127
        %p284 = pneg %p124
        %p285 = pneg %p153
        %p286 = pneg %p150
        %s287 = sand.u32 %s140, 1
        %s288 = scalar_lea.sflag [#allocation5], %s287
        %s289 = sand.u32 %s140, 1
        %s290 = smul.addr %s289, 64
        %s291 = scalar_lea.vmem [#allocation9], %s290
        %s292 = smul.u32 16, %s28
        %s293 = smul.u32 16, %s29
        %s294 = smul.u32 16, %s28
        %p295 = scmp.eq.s32.totalorder %s29, 0
        // Predicated region
        $region49: #{tpu_custom_call.1} parent=35 // pred_check
          %p296 = pneg %p295
        $region50: #{tpu_custom_call.1} parent=35 // pred_check_branch
          %298 = sbr.rel (%p296) target = $region52
        $region51: #{tpu_custom_call.1} parent=35 // pred_region
          %299 = vst [vmem:[#allocation2] sm:$0xff] 0.0
          %300 = vst [vmem:[#allocation2 + $0x8] sm:$0xff] 0.0
          %301 = vst [vmem:[#allocation2 + $0x10] sm:$0xff] 0.0
          %302 = vst [vmem:[#allocation2 + $0x18] sm:$0xff] 0.0
          %303 = vst [vmem:[#allocation2 + $0x20] sm:$0xff] 0.0
          %304 = vst [vmem:[#allocation2 + $0x28] sm:$0xff] 0.0
          %305 = vst [vmem:[#allocation2 + $0x30] sm:$0xff] 0.0
          %306 = vst [vmem:[#allocation2 + $0x38] sm:$0xff] 0.0
          %307 = vst [vmem:[#allocation2 + $0x40] sm:$0xff] 0.0
          %308 = vst [vmem:[#allocation2 + $0x48] sm:$0xff] 0.0
          %309 = vst [vmem:[#allocation2 + $0x50] sm:$0xff] 0.0
          %310 = vst [vmem:[#allocation2 + $0x58] sm:$0xff] 0.0
          %311 = vst [vmem:[#allocation2 + $0x60] sm:$0xff] 0.0
          %312 = vst [vmem:[#allocation2 + $0x68] sm:$0xff] 0.0
          %313 = vst [vmem:[#allocation2 + $0x70] sm:$0xff] 0.0
          %314 = vst [vmem:[#allocation2 + $0x78] sm:$0xff] 0.0
        $region52: #{tpu_custom_call.1} parent=35 // pred_fallthru
          _
        %v315 = vld [vmem:[#allocation2] sm:$0xff]
        %v316 = vld [vmem:[#allocation2 + $0x8] sm:$0xff]
        %v317 = vld [vmem:[#allocation2 + $0x10] sm:$0xff]
        %v318 = vld [vmem:[#allocation2 + $0x18] sm:$0xff]
        %v319 = vld [vmem:[#allocation2 + $0x20] sm:$0xff]
        %v320 = vld [vmem:[#allocation2 + $0x28] sm:$0xff]
        %v321 = vld [vmem:[#allocation2 + $0x30] sm:$0xff]
        %v322 = vld [vmem:[#allocation2 + $0x38] sm:$0xff]
        %v323 = vld [vmem:[#allocation2 + $0x40] sm:$0xff]
        %v324 = vld [vmem:[#allocation2 + $0x48] sm:$0xff]
        %v325 = vld [vmem:[#allocation2 + $0x50] sm:$0xff]
        %v326 = vld [vmem:[#allocation2 + $0x58] sm:$0xff]
        %v327 = vld [vmem:[#allocation2 + $0x60] sm:$0xff]
        %v328 = vld [vmem:[#allocation2 + $0x68] sm:$0xff]
        %v329 = vld [vmem:[#allocation2 + $0x70] sm:$0xff]
        %v330 = vld [vmem:[#allocation2 + $0x78] sm:$0xff]
        %v331 = vld [vmem:[%s246] sm:$0xf]
        %v332 = vld [vmem:[%s246 + $0x4] sm:$0xf]
        %v333 = vld [vmem:[%s246 + $0x8] sm:$0xf]
        %v334 = vld [vmem:[%s246 + $0xc] sm:$0xf]
        %v335 = vld [vmem:[%s246 + $0x10] sm:$0xf]
        %v336 = vld [vmem:[%s246 + $0x14] sm:$0xf]
        %v337 = vld [vmem:[%s246 + $0x18] sm:$0xf]
        %v338 = vld [vmem:[%s246 + $0x1c] sm:$0xf]
        %v339 = vld [vmem:[%s246 + $0x20] sm:$0xf]
        %v340 = vld [vmem:[%s246 + $0x24] sm:$0xf]
        %v341 = vld [vmem:[%s246 + $0x28] sm:$0xf]
        %v342 = vld [vmem:[%s246 + $0x2c] sm:$0xf]
        %v343 = vld [vmem:[%s246 + $0x30] sm:$0xf]
        %v344 = vld [vmem:[%s246 + $0x34] sm:$0xf]
        %v345 = vld [vmem:[%s246 + $0x38] sm:$0xf]
        %v346 = vld [vmem:[%s246 + $0x3c] sm:$0xf]
        %v347 = vld [vmem:[%s256] sm:$0xf]
        %v348 = vld [vmem:[%s256 + $0x4] sm:$0xf]
        %v349 = vld [vmem:[%s256 + $0x8] sm:$0xf]
        %v350 = vld [vmem:[%s256 + $0xc] sm:$0xf]
        %v351 = vld [vmem:[%s256 + $0x10] sm:$0xf]
        %v352 = vld [vmem:[%s256 + $0x14] sm:$0xf]
        %v353 = vld [vmem:[%s256 + $0x18] sm:$0xf]
        %v354 = vld [vmem:[%s256 + $0x1c] sm:$0xf]
        %v355 = vld [vmem:[%s256 + $0x20] sm:$0xf]
        %v356 = vld [vmem:[%s256 + $0x24] sm:$0xf]
        %v357 = vld [vmem:[%s256 + $0x28] sm:$0xf]
        %v358 = vld [vmem:[%s256 + $0x2c] sm:$0xf]
        %v359 = vld [vmem:[%s256 + $0x30] sm:$0xf]
        %v360 = vld [vmem:[%s256 + $0x34] sm:$0xf]
        %v361 = vld [vmem:[%s256 + $0x38] sm:$0xf]
        %v362 = vld [vmem:[%s256 + $0x3c] sm:$0xf]
        %v379 = vunpack.c.l.b16 %v331
        %v380 = vunpack.c.l.b16 %v332
        %v381 = vunpack.c.l.b16 %v333
        %v382 = vunpack.c.l.b16 %v334
        %v383 = vunpack.c.l.b16 %v335
        %v384 = vunpack.c.l.b16 %v336
        %v385 = vunpack.c.l.b16 %v337
        %v386 = vunpack.c.l.b16 %v338
        %v387 = vunpack.c.l.b16 %v339
        %v388 = vunpack.c.l.b16 %v340
        %v389 = vunpack.c.l.b16 %v341
        %v390 = vunpack.c.l.b16 %v342
        %v391 = vunpack.c.l.b16 %v343
        %v392 = vunpack.c.l.b16 %v344
        %v393 = vunpack.c.l.b16 %v345
        %v394 = vunpack.c.l.b16 %v346
        %v395 = vpack.c.b16 %v380, %v379
        %v396 = vpack.c.b16 %v382, %v381
        %v397 = vpack.c.b16 %v384, %v383
        %v398 = vpack.c.b16 %v386, %v385
        %v399 = vpack.c.b16 %v388, %v387
        %v400 = vpack.c.b16 %v390, %v389
        %v401 = vpack.c.b16 %v392, %v391
        %v402 = vpack.c.b16 %v394, %v393
        %v427 = vunpack.c.l.b16 %v347
        %v428 = vunpack.c.l.b16 %v348
        %v429 = vunpack.c.l.b16 %v349
        %v430 = vunpack.c.l.b16 %v350
        %v431 = vunpack.c.l.b16 %v351
        %v432 = vunpack.c.l.b16 %v352
        %v433 = vunpack.c.l.b16 %v353
        %v434 = vunpack.c.l.b16 %v354
        %v435 = vunpack.c.l.b16 %v355
        %v436 = vunpack.c.l.b16 %v356
        %v437 = vunpack.c.l.b16 %v357
        %v438 = vunpack.c.l.b16 %v358
        %v439 = vunpack.c.l.b16 %v359
        %v440 = vunpack.c.l.b16 %v360
        %v441 = vunpack.c.l.b16 %v361
        %v442 = vunpack.c.l.b16 %v362
        %v443 = vpack.c.b16 %v428, %v427
        %v444 = vpack.c.b16 %v430, %v429
        %v445 = vpack.c.b16 %v432, %v431
        %v446 = vpack.c.b16 %v434, %v433
        %v447 = vpack.c.b16 %v436, %v435
        %v448 = vpack.c.b16 %v438, %v437
        %v449 = vpack.c.b16 %v440, %v439
        %v450 = vpack.c.b16 %v442, %v441
        %459 = vmatpush.bf16.msra.mxu0 %v450
        %460 = vmatpush.bf16.msra.mxu0 %v449
        %461 = vmatpush.bf16.msra.mxu0 %v448
        %462 = vmatpush.bf16.msra.mxu0 %v447
        %463 = vmatpush.bf16.msra.mxu0 %v446
        %464 = vmatpush.bf16.msra.mxu0 %v445
        %465 = vmatpush.bf16.msra.mxu0 %v444
        %466 = vmatpush.bf16.msra.mxu0 %v443
        %467 = vmatmul.bf16.gmra.mxu0 %v395
        %v468 = vpop.f32.mrf.mxu0
        %v469 = vadd.f32 0.0, %v468
        %v470 = vpop.f32.mrf.mxu0
        %v471 = vadd.f32 0.0, %v470
        %472 = vmatmul.bf16.gmra.mxu0 %v396
        %v473 = vpop.f32.mrf.mxu0
        %v474 = vadd.f32 0.0, %v473
        %v475 = vpop.f32.mrf.mxu0
        %v476 = vadd.f32 0.0, %v475
        %477 = vmatmul.bf16.gmra.mxu0 %v397
        %v478 = vpop.f32.mrf.mxu0
        %v479 = vadd.f32 0.0, %v478
        %v480 = vpop.f32.mrf.mxu0
        %v481 = vadd.f32 0.0, %v480
        %482 = vmatmul.bf16.gmra.mxu0 %v398
        %v483 = vpop.f32.mrf.mxu0
        %v484 = vadd.f32 0.0, %v483
        %v485 = vpop.f32.mrf.mxu0
        %v486 = vadd.f32 0.0, %v485
        %487 = vmatmul.bf16.gmra.mxu0 %v399
        %v488 = vpop.f32.mrf.mxu0
        %v489 = vadd.f32 0.0, %v488
        %v490 = vpop.f32.mrf.mxu0
        %v491 = vadd.f32 0.0, %v490
        %492 = vmatmul.bf16.gmra.mxu0 %v400
        %v493 = vpop.f32.mrf.mxu0
        %v494 = vadd.f32 0.0, %v493
        %v495 = vpop.f32.mrf.mxu0
        %v496 = vadd.f32 0.0, %v495
        %497 = vmatmul.bf16.gmra.mxu0 %v401
        %v498 = vpop.f32.mrf.mxu0
        %v499 = vadd.f32 0.0, %v498
        %v500 = vpop.f32.mrf.mxu0
        %v501 = vadd.f32 0.0, %v500
        %502 = vmatmul.bf16.gmra.mxu0 %v402
        %v503 = vpop.f32.mrf.mxu0
        %v504 = vadd.f32 0.0, %v503
        %v505 = vpop.f32.mrf.mxu0
        %v506 = vadd.f32 0.0, %v505
        %507 = vdwg.mxu0
        %v508 = vadd.f32 %v315, %v469
        %v509 = vadd.f32 %v316, %v471
        %v510 = vadd.f32 %v317, %v474
        %v511 = vadd.f32 %v318, %v476
        %v512 = vadd.f32 %v319, %v479
        %v513 = vadd.f32 %v320, %v481
        %v514 = vadd.f32 %v321, %v484
        %v515 = vadd.f32 %v322, %v486
        %v516 = vadd.f32 %v323, %v489
        %v517 = vadd.f32 %v324, %v491
        %v518 = vadd.f32 %v325, %v494
        %v519 = vadd.f32 %v326, %v496
        %v520 = vadd.f32 %v327, %v499
        %v521 = vadd.f32 %v328, %v501
        %v522 = vadd.f32 %v329, %v504
        %v523 = vadd.f32 %v330, %v506
        %524 = vst [vmem:[#allocation2] sm:$0xff] %v508
        %525 = vst [vmem:[#allocation2 + $0x8] sm:$0xff] %v509
        %526 = vst [vmem:[#allocation2 + $0x10] sm:$0xff] %v510
        %527 = vst [vmem:[#allocation2 + $0x18] sm:$0xff] %v511
        %528 = vst [vmem:[#allocation2 + $0x20] sm:$0xff] %v512
        %529 = vst [vmem:[#allocation2 + $0x28] sm:$0xff] %v513
        %530 = vst [vmem:[#allocation2 + $0x30] sm:$0xff] %v514
        %531 = vst [vmem:[#allocation2 + $0x38] sm:$0xff] %v515
        %532 = vst [vmem:[#allocation2 + $0x40] sm:$0xff] %v516
        %533 = vst [vmem:[#allocation2 + $0x48] sm:$0xff] %v517
        %534 = vst [vmem:[#allocation2 + $0x50] sm:$0xff] %v518
        %535 = vst [vmem:[#allocation2 + $0x58] sm:$0xff] %v519
        %536 = vst [vmem:[#allocation2 + $0x60] sm:$0xff] %v520
        %537 = vst [vmem:[#allocation2 + $0x68] sm:$0xff] %v521
        %538 = vst [vmem:[#allocation2 + $0x70] sm:$0xff] %v522
        %539 = vst [vmem:[#allocation2 + $0x78] sm:$0xff] %v523
        %p540 = scmp.eq.s32.totalorder %s29, 1
        // Predicated region
        $region53: #{tpu_custom_call.1} parent=35 // pred_check
          %p541 = pneg %p540
        $region54: #{tpu_custom_call.1} parent=35 // pred_check_branch
          %543 = sbr.rel (%p541) target = $region56
        $region55: #{tpu_custom_call.1} parent=35 // pred_region
          %v544 = vld [vmem:[#allocation2] sm:$0xff]
          %v545 = vld [vmem:[#allocation2 + $0x8] sm:$0xff]
          %v546 = vld [vmem:[#allocation2 + $0x10] sm:$0xff]
          %v547 = vld [vmem:[#allocation2 + $0x18] sm:$0xff]
          %v548 = vld [vmem:[#allocation2 + $0x20] sm:$0xff]
          %v549 = vld [vmem:[#allocation2 + $0x28] sm:$0xff]
          %v550 = vld [vmem:[#allocation2 + $0x30] sm:$0xff]
          %v551 = vld [vmem:[#allocation2 + $0x38] sm:$0xff]
          %v552 = vld [vmem:[#allocation2 + $0x40] sm:$0xff]
          %v553 = vld [vmem:[#allocation2 + $0x48] sm:$0xff]
          %v554 = vld [vmem:[#allocation2 + $0x50] sm:$0xff]
          %v555 = vld [vmem:[#allocation2 + $0x58] sm:$0xff]
          %v556 = vld [vmem:[#allocation2 + $0x60] sm:$0xff]
          %v557 = vld [vmem:[#allocation2 + $0x68] sm:$0xff]
          %v558 = vld [vmem:[#allocation2 + $0x70] sm:$0xff]
          %v559 = vld [vmem:[#allocation2 + $0x78] sm:$0xff]
          %v560 = vld [vmem:[#allocation8] sm:$0xff]
          %v561 = vld [vmem:[#allocation8 + $0x8] sm:$0xff]
          %v562 = vld [vmem:[#allocation8 + $0x10] sm:$0xff]
          %v563 = vld [vmem:[#allocation8 + $0x18] sm:$0xff]
          %v564 = vld [vmem:[#allocation8 + $0x20] sm:$0xff]
          %v565 = vld [vmem:[#allocation8 + $0x28] sm:$0xff]
          %v566 = vld [vmem:[#allocation8 + $0x30] sm:$0xff]
          %v567 = vld [vmem:[#allocation8 + $0x38] sm:$0xff]
          %v568 = vld [vmem:[#allocation8 + $0x40] sm:$0xff]
          %v569 = vld [vmem:[#allocation8 + $0x48] sm:$0xff]
          %v570 = vld [vmem:[#allocation8 + $0x50] sm:$0xff]
          %v571 = vld [vmem:[#allocation8 + $0x58] sm:$0xff]
          %v572 = vld [vmem:[#allocation8 + $0x60] sm:$0xff]
          %v573 = vld [vmem:[#allocation8 + $0x68] sm:$0xff]
          %v574 = vld [vmem:[#allocation8 + $0x70] sm:$0xff]
          %v575 = vld [vmem:[#allocation8 + $0x78] sm:$0xff]
          %v576 = vld [vmem:[%s3] sm:$0x1]
          %v578 = vperm.slane %v576, 0
          %580 = vmatpush.msra.mxu0 %v575
          %581 = vmatpush.msra.mxu0 %v574
          %582 = vmatpush.msra.mxu0 %v573
          %583 = vmatpush.msra.mxu0 %v572
          %584 = vmatpush.msra.mxu0 %v571
          %585 = vmatpush.msra.mxu0 %v570
          %586 = vmatpush.msra.mxu0 %v569
          %587 = vmatpush.msra.mxu0 %v568
          %588 = vmatpush.msra.mxu0 %v567
          %589 = vmatpush.msra.mxu0 %v566
          %590 = vmatpush.msra.mxu0 %v565
          %591 = vmatpush.msra.mxu0 %v564
          %592 = vmatpush.msra.mxu0 %v563
          %593 = vmatpush.msra.mxu0 %v562
          %594 = vmatpush.msra.mxu0 %v561
          %595 = vmatpush.msra.mxu0 %v560
          %596 = vmatmul.f32.gmra.mxu0 %v544
          %v597 = vpop.f32.mrf.mxu0
          %v598 = vadd.f32 %v578, %v597
          %599 = vmatmul.f32.gmra.mxu0 %v545
          %v600 = vpop.f32.mrf.mxu0
          %v601 = vadd.f32 %v578, %v600
          %602 = vmatmul.f32.gmra.mxu0 %v546
          %v603 = vpop.f32.mrf.mxu0
          %v604 = vadd.f32 %v578, %v603
          %605 = vmatmul.f32.gmra.mxu0 %v547
          %v606 = vpop.f32.mrf.mxu0
          %v607 = vadd.f32 %v578, %v606
          %608 = vmatmul.f32.gmra.mxu0 %v548
          %v609 = vpop.f32.mrf.mxu0
          %v610 = vadd.f32 %v578, %v609
          %611 = vmatmul.f32.gmra.mxu0 %v549
          %v612 = vpop.f32.mrf.mxu0
          %v613 = vadd.f32 %v578, %v612
          %614 = vmatmul.f32.gmra.mxu0 %v550
          %v615 = vpop.f32.mrf.mxu0
          %v616 = vadd.f32 %v578, %v615
          %617 = vmatmul.f32.gmra.mxu0 %v551
          %v618 = vpop.f32.mrf.mxu0
          %v619 = vadd.f32 %v578, %v618
          %620 = vmatmul.f32.gmra.mxu0 %v552
          %v621 = vpop.f32.mrf.mxu0
          %v622 = vadd.f32 %v578, %v621
          %623 = vmatmul.f32.gmra.mxu0 %v553
          %v624 = vpop.f32.mrf.mxu0
          %v625 = vadd.f32 %v578, %v624
          %626 = vmatmul.f32.gmra.mxu0 %v554
          %v627 = vpop.f32.mrf.mxu0
          %v628 = vadd.f32 %v578, %v627
          %629 = vmatmul.f32.gmra.mxu0 %v555
          %v630 = vpop.f32.mrf.mxu0
          %v631 = vadd.f32 %v578, %v630
          %632 = vmatmul.f32.gmra.mxu0 %v556
          %v633 = vpop.f32.mrf.mxu0
          %v634 = vadd.f32 %v578, %v633
          %635 = vmatmul.f32.gmra.mxu0 %v557
          %v636 = vpop.f32.mrf.mxu0
          %v637 = vadd.f32 %v578, %v636
          %638 = vmatmul.f32.gmra.mxu0 %v558
          %v639 = vpop.f32.mrf.mxu0
          %v640 = vadd.f32 %v578, %v639
          %641 = vmatmul.f32.gmra.mxu0 %v559
          %v642 = vpop.f32.mrf.mxu0
          %v643 = vadd.f32 %v578, %v642
          %644 = vdwg.mxu0
          %v645 = vmax.f32 %v598, 0.0
          %v646 = vmax.f32 %v601, 0.0
          %v647 = vmax.f32 %v604, 0.0
          %v648 = vmax.f32 %v607, 0.0
          %v649 = vmax.f32 %v610, 0.0
          %v650 = vmax.f32 %v613, 0.0
          %v651 = vmax.f32 %v616, 0.0
          %v652 = vmax.f32 %v619, 0.0
          %v653 = vmax.f32 %v622, 0.0
          %v654 = vmax.f32 %v625, 0.0
          %v655 = vmax.f32 %v628, 0.0
          %v656 = vmax.f32 %v631, 0.0
          %v657 = vmax.f32 %v634, 0.0
          %v658 = vmax.f32 %v637, 0.0
          %v659 = vmax.f32 %v640, 0.0
          %v660 = vmax.f32 %v643, 0.0
          %v661 = vpack.c.bf16 %v645, %v645
          %v662 = vpack.c.bf16 %v646, %v646
          %v663 = vpack.c.bf16 %v647, %v647
          %v664 = vpack.c.bf16 %v648, %v648
          %v665 = vpack.c.bf16 %v649, %v649
          %v666 = vpack.c.bf16 %v650, %v650
          %v667 = vpack.c.bf16 %v651, %v651
          %v668 = vpack.c.bf16 %v652, %v652
          %v669 = vpack.c.bf16 %v653, %v653
          %v670 = vpack.c.bf16 %v654, %v654
          %v671 = vpack.c.bf16 %v655, %v655
          %v672 = vpack.c.bf16 %v656, %v656
          %v673 = vpack.c.bf16 %v657, %v657
          %v674 = vpack.c.bf16 %v658, %v658
          %v675 = vpack.c.bf16 %v659, %v659
          %v676 = vpack.c.bf16 %v660, %v660
          %677 = vst [vmem:[%s291] sm:$0xf] %v661
          %678 = vst [vmem:[%s291 + $0x4] sm:$0xf] %v662
          %679 = vst [vmem:[%s291 + $0x8] sm:$0xf] %v663
          %680 = vst [vmem:[%s291 + $0xc] sm:$0xf] %v664
          %681 = vst [vmem:[%s291 + $0x10] sm:$0xf] %v665
          %682 = vst [vmem:[%s291 + $0x14] sm:$0xf] %v666
          %683 = vst [vmem:[%s291 + $0x18] sm:$0xf] %v667
          %684 = vst [vmem:[%s291 + $0x1c] sm:$0xf] %v668
          %685 = vst [vmem:[%s291 + $0x20] sm:$0xf] %v669
          %686 = vst [vmem:[%s291 + $0x24] sm:$0xf] %v670
          %687 = vst [vmem:[%s291 + $0x28] sm:$0xf] %v671
          %688 = vst [vmem:[%s291 + $0x2c] sm:$0xf] %v672
          %689 = vst [vmem:[%s291 + $0x30] sm:$0xf] %v673
          %690 = vst [vmem:[%s291 + $0x34] sm:$0xf] %v674
          %691 = vst [vmem:[%s291 + $0x38] sm:$0xf] %v675
          %692 = vst [vmem:[%s291 + $0x3c] sm:$0xf] %v676
        $region56: #{tpu_custom_call.1} parent=35 // pred_fallthru
          _
        %s693 = sand.u32 %s140, 1
        %s694 = scalar_lea.sflag [#allocation5], %s693
        %s695 = sand.u32 %s140, 1
        %s696 = smul.addr %s695, 64
        %s697 = scalar_lea.vmem [#allocation9], %s696
        // Predicated region
        $region57: #{tpu_custom_call.1} parent=35 // pred_check
          %p698 = pneg %p150
        $region58: #{tpu_custom_call.1} parent=35 // pred_check_branch
          %700 = sbr.rel (%p698) target = $region60
        $region59: #{tpu_custom_call.1} parent=35 // pred_region
          %s701 = smul.u32 16, %s28
          %703 = vsyncadd %s694, 0
          %s704 = smul.addr %s701, 4
          %s705 = scalar_lea.hbm %s4, %s704
          %s706 = sshll.u32 %s697, 4
          %s707 = int_to_ptr.vmem [resolvable:$true] %s706
          %s708 = sshll.u32 %s705, 4
          %s709 = int_to_ptr.hbm [resolvable:$true] %s708
          %714 = dma.vmem_to_hbm [thread:$0]  %s707, 1024, %s709, %s694, 64, 64, 4
        $region60: #{tpu_custom_call.1} parent=35 // pred_fallthru
          _
      $region36: #{tpu_custom_call.1} parent=5 // pred_fallthru
        _
      %p715 = scmp.le.s32.totalorder 2, %s19
      // Predicated region
      $region61: #{tpu_custom_call.1} parent=5 // pred_check
        %p716 = pneg %p715
      $region62: #{tpu_custom_call.1} parent=5 // pred_check_branch
        %718 = sbr.rel (%p716) target = $region64
      $region63: #{tpu_custom_call.1} parent=5 // pred_region
        %s719 = ssub.s32 %s19, 2
        // Predicated region
        $region65: #{tpu_custom_call.1} parent=63 // pred_check
          %p720 = pneg %p156
        $region66: #{tpu_custom_call.1} parent=63 // pred_check_branch
          %722 = sbr.rel (%p720) target = $region68
        $region67: #{tpu_custom_call.1} parent=63 // pred_region
          %s723 = sand.u32 %s141, 1
          %s724 = scalar_lea.sflag [#allocation5], %s723
          %s725 = sand.u32 %s141, 1
          %s726 = smul.addr %s725, 64
          %s727 = scalar_lea.vmem [#allocation9], %s726
          %729 = dma.done %s724, 1024
        $region68: #{tpu_custom_call.1} parent=63 // pred_fallthru
          _
      $region64: #{tpu_custom_call.1} parent=5 // pred_fallthru
        _
    $region6: #{tpu_custom_call.1} parent=1 // loop_footer
      %s23 = sadd.s32 1, %s19
    $region7: #{tpu_custom_call.1} parent=1 // loop_footer_branch
      %18 = sbr.rel target = $region3
    $region8: #{tpu_custom_call.1} parent=1 // loop_exit
      _
    %730 = vsyncpa [#allocation4], 1
    %s731 = scalar_lea.sflag [#allocation4], 1
    %732 = vsyncpa %s731, 1
    %733 = vsyncpa [#allocation7], 1
    %s734 = scalar_lea.sflag [#allocation7], 1
    %735 = vsyncpa %s734, 1
    %736 = vsyncpa [#allocation5], 1
    %s737 = scalar_lea.sflag [#allocation5], 1
    %738 = vsyncpa %s737, 1

</llo_original>
